<compile_context>
chip_gen: v7x
topology: tpu7x:2x2x1
jax: 0.10.0
libtpu: 0.0.40
codegen_flags: <defaults>
</compile_context>

<pallas_src>
import jax
import jax.numpy as jnp
from jax.experimental import pallas as pl
from jax.experimental.pallas import tpu as pltpu


# ----------------------------------------------------------------------------
# One grid step = (batch block i, head h):
#   q,k,v = x @ Wq[h]*scale, x @ Wk[h], x @ Wv[h]        (depth-E matmuls, bf16)
#   s = q @ k^T + causal_mask ; p = softmax(s)
#   o_ref += (p @ v) @ W_proj[h*H:(h+1)*H, :]   (+ bias on h == 0)
# ----------------------------------------------------------------------------
def _mha_head_kernel(x_ref, wq_ref, wk_ref, wv_ref, wp_ref, b_ref, o_ref):
    h = pl.program_id(1)
    bb, T, E = x_ref.shape
    H = wq_ref.shape[-1]

    # Leading-dim collapse only (lane dim untouched) -> free.
    x2d = x_ref[...].reshape(bb * T, E)                                  # bf16

    # Per-head projections; scale already folded into W_q; f32 accumulation.
    q = jnp.dot(x2d, wq_ref[0], preferred_element_type=jnp.float32)     # (bb*T, H)
    k = jnp.dot(x2d, wk_ref[0], preferred_element_type=jnp.float32)
    v = jnp.dot(x2d, wv_ref[0], preferred_element_type=jnp.float32)
    q = q.reshape(bb, T, H).astype(jnp.bfloat16)
    k = k.reshape(bb, T, H).astype(jnp.bfloat16)
    v = v.reshape(bb, T, H).astype(jnp.bfloat16)

    # q @ k^T without an explicit transpose: contract last dims, batch over bb.
    s = jax.lax.dot_general(q, k, (((2,), (2,)), ((0,), (0,))),
                            preferred_element_type=jnp.float32)         # (bb, T, T)

    # Causal mask built in-kernel (additive; no DMA, no float equality).
    row = jax.lax.broadcasted_iota(jnp.int32, (T, T), 0)
    col = jax.lax.broadcasted_iota(jnp.int32, (T, T), 1)
    s = s + jnp.where(row >= col, 0.0, -1e30)

    # Numerically-stable softmax; divide -> EUP approx reciprocal + Newton step.
    s_max = jnp.max(s, axis=-1, keepdims=True)
    p = jnp.exp(s - s_max)
    denom = jnp.sum(p, axis=-1, keepdims=True)
    inv = pl.reciprocal(denom, approx=True)
    inv = inv * (2.0 - denom * inv)
    p = (p * inv).astype(jnp.bfloat16)

    o_h = jax.lax.dot_general(p, v, (((2,), (1,)), ((0,), (0,))),
                              preferred_element_type=jnp.float32)       # (bb, T, H)

    # This head's slice of the output projection: (bb*T, H) @ (H, E).
    contrib = jnp.dot(o_h.reshape(bb * T, H).astype(jnp.bfloat16), wp_ref[0],
                      preferred_element_type=jnp.float32).reshape(bb, T, E)

    @pl.when(h == 0)
    def _():
        o_ref[...] = jnp.broadcast_to(b_ref[...], o_ref.shape).astype(jnp.float32)

    o_ref[...] += contrib                                                # resident acc


def multi_head_attention(x, wq, wk, wv, w_proj, b_proj, *, batch_block=None):
    """
    x:        (B, T, E)  float32
    wq/wk/wv: (num_heads, E, H)   per-head projection weights (for x @ W)
    w_proj:   (E, E)              output projection (already transposed for y @ W)
    b_proj:   (E,)
    returns:  (B, T, E)  float32
    """
    B, T, E = x.shape
    num_heads, _, H = wq.shape
    assert num_heads * H == E

    # Matches the PyTorch module: scale by C = embed_size (not head_size).
    scale = float(E) ** (-0.5)

    # bf16 operands for the MXU; scale folded into W_q (free).
    x_bf = x.astype(jnp.bfloat16)
    wq_b = (wq * scale).astype(jnp.bfloat16)                 # (nh, E, H)
    wk_b = wk.astype(jnp.bfloat16)
    wv_b = wv.astype(jnp.bfloat16)
    wp_b = w_proj.reshape(num_heads, H, E).astype(jnp.bfloat16)   # head h -> rows h*H:(h+1)*H
    b2 = b_proj.reshape(1, E).astype(jnp.float32)

    # >= 4 parallel steps when possible (pipelining + v7x megacore), >= 2 otherwise.
    if batch_block is None:
        if B % 4 == 0:
            batch_block = B // 4
        elif B % 2 == 0:
            batch_block = B // 2
        else:
            batch_block = B
    assert B % batch_block == 0
    bb = batch_block
    grid = (B // bb, num_heads)

    # Scoped-VMEM budget from the actual per-step footprint (v5e default is 16 MiB).
    bf16_b, f32_b = 2, 4
    per_step = (
        2 * bb * T * E * bf16_b          # x block (double-buffered)
        + 2 * bb * T * E * f32_b         # resident/double-buffered out block
        + 2 * 3 * E * H * bf16_b         # per-head W_q/W_k/W_v slices
        + 2 * H * E * bf16_b             # W_proj head slice
        + 2 * E * f32_b                  # bias
        + bb * T * (4 * H + 2 * T + E) * f32_b   # q,k,v,o_h, s,p, contrib
    )
    vmem_limit = int(min(max(2 * per_step + (2 << 20), 8 << 20), 100 << 20))

    return pl.pallas_call(
        _mha_head_kernel,
        out_shape=jax.ShapeDtypeStruct((B, T, E), jnp.float32),
        grid=grid,
        in_specs=[
            pl.BlockSpec((bb, T, E), lambda i, h: (i, 0, 0)),     # x (resident over h)
            pl.BlockSpec((1, E, H), lambda i, h: (h, 0, 0)),      # W_q (scaled)
            pl.BlockSpec((1, E, H), lambda i, h: (h, 0, 0)),      # W_k
            pl.BlockSpec((1, E, H), lambda i, h: (h, 0, 0)),      # W_v
            pl.BlockSpec((1, H, E), lambda i, h: (h, 0, 0)),      # W_proj rows of head h
            pl.BlockSpec((1, E), lambda i, h: (0, 0)),            # bias (constant)
        ],
        out_specs=pl.BlockSpec((bb, T, E), lambda i, h: (i, 0, 0)),
        compiler_params=pltpu.CompilerParams(
            dimension_semantics=("parallel", "arbitrary"),
            vmem_limit_bytes=vmem_limit),
    )(x_bf, wq_b, wk_b, wv_b, wp_b, b2)


# ----------------------------------------------------------------------------
# Pure-JAX reference (mirrors the PyTorch forward, eval mode) for verification.
# ----------------------------------------------------------------------------
def _reference(x, wq, wk, wv, w_proj, b_proj):
    B, T, E = x.shape
    scale = float(E) ** (-0.5)
    tril = jnp.tril(jnp.ones((T, T), dtype=jnp.float32))
    outs = []
    for h in range(wq.shape[0]):
        q = x @ wq[h]
        k = x @ wk[h]
        v = x @ wv[h]
        s = (q @ jnp.swapaxes(k, -2, -1)) * scale
        s = jnp.where(tril == 0.0, -jnp.inf, s)
        p = jax.nn.softmax(s, axis=-1)
        outs.append(p @ v)
    cat = jnp.concatenate(outs, axis=-1)
    return cat @ w_proj + b_proj


if __name__ == "__main__":
    # Small deterministic setup. The PyTorch module passes batch_size as the
    # Head's context_size, so T <= B keeps the original tril-slice valid; the
    # kernel builds the (T, T) causal mask directly, which is equivalent.
    B = 8           # batch size (also context_size of the module's mask buffer)
    T = 8           # sequence length
    E = 32          # embed_size
    num_heads = 4
    H = 8           # head_size  (num_heads * H == E)

    key = jax.random.PRNGKey(0)
    kx, kq, kk, kv, kw, kb = jax.random.split(key, 6)

    # PyTorch nn.Linear default init: U(-1/sqrt(fan_in), 1/sqrt(fan_in))
    lim_e = 1.0 / (E ** 0.5)
    x = jax.random.normal(kx, (B, T, E), dtype=jnp.float32)
    wq = jax.random.uniform(kq, (num_heads, E, H), jnp.float32, -lim_e, lim_e)
    wk = jax.random.uniform(kk, (num_heads, E, H), jnp.float32, -lim_e, lim_e)
    wv = jax.random.uniform(kv, (num_heads, E, H), jnp.float32, -lim_e, lim_e)
    w_proj = jax.random.uniform(kw, (E, E), jnp.float32, -lim_e, lim_e)
    b_proj = jax.random.uniform(kb, (E,), jnp.float32, -lim_e, lim_e)

    out = multi_head_attention(x, wq, wk, wv, w_proj, b_proj)
    out = jax.block_until_ready(out)

    ref = _reference(x, wq, wk, wv, w_proj, b_proj)
    assert out.shape == (B, T, E)
    # Tolerance accounts for bf16 matmul operands (f32 accumulation) and the
    # EUP approximate reciprocal (+ one Newton refinement step) in the softmax.
    assert jnp.allclose(out, ref, atol=3e-2, rtol=3e-2), "mismatch vs reference"

    print("KERNEL_OK")
</pallas_src>

<mosaic_0001>
module attributes {stable_mosaic.version = 11 : i64} {
  func.func @_mha_head_kernel(%arg0: i32, %arg1: i32, %arg2: memref<2x8x32xbf16, #tpu.memory_space<vmem>>, %arg3: memref<1x32x8xbf16, #tpu.memory_space<vmem>>, %arg4: memref<1x32x8xbf16, #tpu.memory_space<vmem>>, %arg5: memref<1x32x8xbf16, #tpu.memory_space<vmem>>, %arg6: memref<1x8x32xbf16, #tpu.memory_space<vmem>>, %arg7: memref<1x32xf32, #tpu.memory_space<vmem>>, %arg8: memref<2x8x32xf32, #tpu.memory_space<vmem>>) attributes {dimension_semantics = [#tpu.dimension_semantics<parallel>, #tpu.dimension_semantics<arbitrary>], iteration_bounds = array<i64: 4, 4>, scalar_prefetch = 0 : i64, scratch_operands = 0 : i64, tpu.core_type = #tpu.core_type<tc>, window_params = [{transform_indices = @transform_0, window_bounds = array<i64: 2, 8, 32>}, {transform_indices = @transform_1, window_bounds = array<i64: 1, 32, 8>}, {transform_indices = @transform_2, window_bounds = array<i64: 1, 32, 8>}, {transform_indices = @transform_3, window_bounds = array<i64: 1, 32, 8>}, {transform_indices = @transform_4, window_bounds = array<i64: 1, 8, 32>}, {pipeline_mode = #tpu.pipeline_mode<synchronous>, transform_indices = @transform_5, window_bounds = array<i64: 1, 32>}, {transform_indices = @transform_6, window_bounds = array<i64: 2, 8, 32>}]} {
    %c0 = arith.constant 0 : index
    %c0_0 = arith.constant 0 : index
    %c0_1 = arith.constant 0 : index
    %0 = vector.load %arg2[%c0, %c0_0, %c0_1] : memref<2x8x32xbf16, #tpu.memory_space<vmem>>, vector<2x8x32xbf16>
    %1 = vector.shape_cast %0 : vector<2x8x32xbf16> to vector<16x32xbf16>
    %c0_2 = arith.constant 0 : index
    %c0_3 = arith.constant 0 : index
    %c0_4 = arith.constant 0 : index
    %2 = vector.load %arg3[%c0_2, %c0_3, %c0_4] : memref<1x32x8xbf16, #tpu.memory_space<vmem>>, vector<1x32x8xbf16>
    %3 = vector.shape_cast %2 : vector<1x32x8xbf16> to vector<32x8xbf16>
    %cst = arith.constant dense<0.000000e+00> : vector<16x8xf32>
    %4 = tpu.matmul %1, %3, %cst {dimension_numbers = #tpu.dot_dimension_numbers<[1], [0], [0], [1], [0, 0, 1, 1], [], []>} : vector<16x32xbf16>, vector<32x8xbf16>, vector<16x8xf32> -> vector<16x8xf32>
    %c0_5 = arith.constant 0 : index
    %c0_6 = arith.constant 0 : index
    %c0_7 = arith.constant 0 : index
    %5 = vector.load %arg4[%c0_5, %c0_6, %c0_7] : memref<1x32x8xbf16, #tpu.memory_space<vmem>>, vector<1x32x8xbf16>
    %6 = vector.shape_cast %5 : vector<1x32x8xbf16> to vector<32x8xbf16>
    %cst_8 = arith.constant dense<0.000000e+00> : vector<16x8xf32>
    %7 = tpu.matmul %1, %6, %cst_8 {dimension_numbers = #tpu.dot_dimension_numbers<[1], [0], [0], [1], [0, 0, 1, 1], [], []>} : vector<16x32xbf16>, vector<32x8xbf16>, vector<16x8xf32> -> vector<16x8xf32>
    %c0_9 = arith.constant 0 : index
    %c0_10 = arith.constant 0 : index
    %c0_11 = arith.constant 0 : index
    %8 = vector.load %arg5[%c0_9, %c0_10, %c0_11] : memref<1x32x8xbf16, #tpu.memory_space<vmem>>, vector<1x32x8xbf16>
    %9 = vector.shape_cast %8 : vector<1x32x8xbf16> to vector<32x8xbf16>
    %cst_12 = arith.constant dense<0.000000e+00> : vector<16x8xf32>
    %10 = tpu.matmul %1, %9, %cst_12 {dimension_numbers = #tpu.dot_dimension_numbers<[1], [0], [0], [1], [0, 0, 1, 1], [], []>} : vector<16x32xbf16>, vector<32x8xbf16>, vector<16x8xf32> -> vector<16x8xf32>
    %11 = vector.shape_cast %4 : vector<16x8xf32> to vector<2x8x8xf32>
    %12 = arith.truncf %11 : vector<2x8x8xf32> to vector<2x8x8xbf16>
    %13 = vector.shape_cast %7 : vector<16x8xf32> to vector<2x8x8xf32>
    %14 = arith.truncf %13 : vector<2x8x8xf32> to vector<2x8x8xbf16>
    %15 = vector.shape_cast %10 : vector<16x8xf32> to vector<2x8x8xf32>
    %16 = arith.truncf %15 : vector<2x8x8xf32> to vector<2x8x8xbf16>
    %cst_13 = arith.constant dense<0.000000e+00> : vector<2x8x8xf32>
    %17 = tpu.matmul %12, %14, %cst_13 {dimension_numbers = #tpu.dot_dimension_numbers<[2], [2], [1], [1], [0, 0, 0, 1, 1, 1], [0], [0]>} : vector<2x8x8xbf16>, vector<2x8x8xbf16>, vector<2x8x8xf32> -> vector<2x8x8xf32>
    %18 = tpu.iota {dimensions = array<i32: 0>} : vector<8x8xi32>
    %19 = tpu.iota {dimensions = array<i32: 1>} : vector<8x8xi32>
    %20 = arith.cmpi sge, %18, %19 : vector<8x8xi32>
    %cst_14 = arith.constant 0.000000e+00 : f32
    %cst_15 = arith.constant -1.000000e+30 : f32
    %21 = vector.broadcast %cst_14 : f32 to vector<8x8xf32>
    %22 = vector.broadcast %cst_15 : f32 to vector<8x8xf32>
    %23 = arith.select %20, %21, %22 : vector<8x8xi1>, vector<8x8xf32>
    %24 = vector.shape_cast %23 : vector<8x8xf32> to vector<1x8x8xf32>
    %25 = vector.broadcast %24 : vector<1x8x8xf32> to vector<2x8x8xf32>
    %26 = arith.addf %17, %25 : vector<2x8x8xf32>
    %cst_16 = arith.constant dense<0xFF800000> : vector<2x8xf32>
    %27 = vector.multi_reduction <maximumf>, %26, %cst_16 [2] : vector<2x8x8xf32> to vector<2x8xf32>
    %28 = vector.shape_cast %27 : vector<2x8xf32> to vector<2x8x1xf32>
    %29 = vector.broadcast %28 : vector<2x8x1xf32> to vector<2x8x8xf32>
    %30 = arith.subf %26, %29 : vector<2x8x8xf32>
    %31 = math.exp %30 : vector<2x8x8xf32>
    %cst_17 = arith.constant dense<0.000000e+00> : vector<2x8xf32>
    %32 = vector.multi_reduction <add>, %31, %cst_17 [2] : vector<2x8x8xf32> to vector<2x8xf32>
    %33 = vector.shape_cast %32 : vector<2x8xf32> to vector<2x8x1xf32>
    %34 = tpu.reciprocal %33 {approx = true} : vector<2x8x1xf32> -> vector<2x8x1xf32>
    %35 = arith.mulf %33, %34 : vector<2x8x1xf32>
    %cst_18 = arith.constant 2.000000e+00 : f32
    %36 = vector.broadcast %cst_18 : f32 to vector<2x8x1xf32>
    %37 = arith.subf %36, %35 : vector<2x8x1xf32>
    %38 = arith.mulf %34, %37 : vector<2x8x1xf32>
    %39 = vector.broadcast %38 : vector<2x8x1xf32> to vector<2x8x8xf32>
    %40 = arith.mulf %31, %39 : vector<2x8x8xf32>
    %41 = arith.truncf %40 : vector<2x8x8xf32> to vector<2x8x8xbf16>
    %cst_19 = arith.constant dense<0.000000e+00> : vector<2x8x8xf32>
    %42 = tpu.matmul %41, %16, %cst_19 {dimension_numbers = #tpu.dot_dimension_numbers<[2], [1], [1], [2], [0, 0, 0, 1, 1, 2], [0], [0]>} : vector<2x8x8xbf16>, vector<2x8x8xbf16>, vector<2x8x8xf32> -> vector<2x8x8xf32>
    %43 = vector.shape_cast %42 : vector<2x8x8xf32> to vector<16x8xf32>
    %44 = arith.truncf %43 : vector<16x8xf32> to vector<16x8xbf16>
    %c0_20 = arith.constant 0 : index
    %c0_21 = arith.constant 0 : index
    %c0_22 = arith.constant 0 : index
    %45 = vector.load %arg6[%c0_20, %c0_21, %c0_22] : memref<1x8x32xbf16, #tpu.memory_space<vmem>>, vector<1x8x32xbf16>
    %46 = vector.shape_cast %45 : vector<1x8x32xbf16> to vector<8x32xbf16>
    %cst_23 = arith.constant dense<0.000000e+00> : vector<16x32xf32>
    %47 = tpu.matmul %44, %46, %cst_23 {dimension_numbers = #tpu.dot_dimension_numbers<[1], [0], [0], [1], [0, 0, 1, 1], [], []>} : vector<16x8xbf16>, vector<8x32xbf16>, vector<16x32xf32> -> vector<16x32xf32>
    %48 = vector.shape_cast %47 : vector<16x32xf32> to vector<2x8x32xf32>
    %c0_i32 = arith.constant 0 : i32
    %49 = arith.cmpi eq, %arg1, %c0_i32 : i32
    %50 = arith.extui %49 : i1 to i32
    %c0_i32_24 = arith.constant 0 : i32
    %51 = arith.cmpi ne, %50, %c0_i32_24 : i32
    scf.if %51 {
      %c0_31 = arith.constant 0 : index
      %c0_32 = arith.constant 0 : index
      %55 = vector.load %arg7[%c0_31, %c0_32] : memref<1x32xf32, #tpu.memory_space<vmem>>, vector<1x32xf32>
      %56 = vector.shape_cast %55 : vector<1x32xf32> to vector<1x1x32xf32>
      %57 = vector.broadcast %56 : vector<1x1x32xf32> to vector<2x8x32xf32>
      %c0_33 = arith.constant 0 : index
      %c0_34 = arith.constant 0 : index
      %c0_35 = arith.constant 0 : index
      %58 = vector.load %arg8[%c0_33, %c0_34, %c0_35] : memref<2x8x32xf32, #tpu.memory_space<vmem>>, vector<2x8x32xf32>
      tpu.vector_store %arg8[%c0_33, %c0_34, %c0_35], %57 {strides = array<i32>} : memref<2x8x32xf32, #tpu.memory_space<vmem>>, vector<2x8x32xf32>,
    } else {
    }
    %c0_25 = arith.constant 0 : index
    %c0_26 = arith.constant 0 : index
    %c0_27 = arith.constant 0 : index
    %52 = vector.load %arg8[%c0_25, %c0_26, %c0_27] : memref<2x8x32xf32, #tpu.memory_space<vmem>>, vector<2x8x32xf32>
    %53 = arith.addf %52, %48 : vector<2x8x32xf32>
    %c0_28 = arith.constant 0 : index
    %c0_29 = arith.constant 0 : index
    %c0_30 = arith.constant 0 : index
    %54 = vector.load %arg8[%c0_28, %c0_29, %c0_30] : memref<2x8x32xf32, #tpu.memory_space<vmem>>, vector<2x8x32xf32>
    tpu.vector_store %arg8[%c0_28, %c0_29, %c0_30], %53 {strides = array<i32>} : memref<2x8x32xf32, #tpu.memory_space<vmem>>, vector<2x8x32xf32>,
    return
  }
  func.func @transform_0(%arg0: i32, %arg1: i32) -> (i32, i32, i32) {
    %c0_i32 = arith.constant 0 : i32
    %c0_i32_0 = arith.constant 0 : i32
    %c0_i32_1 = arith.constant 0 : i32
    return %arg0, %c0_i32, %c0_i32_0 : i32, i32, i32
  }
  func.func @transform_1(%arg0: i32, %arg1: i32) -> (i32, i32, i32) {
    %c0_i32 = arith.constant 0 : i32
    %c0_i32_0 = arith.constant 0 : i32
    %c0_i32_1 = arith.constant 0 : i32
    return %arg1, %c0_i32, %c0_i32_0 : i32, i32, i32
  }
  func.func @transform_2(%arg0: i32, %arg1: i32) -> (i32, i32, i32) {
    %c0_i32 = arith.constant 0 : i32
    %c0_i32_0 = arith.constant 0 : i32
    %c0_i32_1 = arith.constant 0 : i32
    return %arg1, %c0_i32, %c0_i32_0 : i32, i32, i32
  }
  func.func @transform_3(%arg0: i32, %arg1: i32) -> (i32, i32, i32) {
    %c0_i32 = arith.constant 0 : i32
    %c0_i32_0 = arith.constant 0 : i32
    %c0_i32_1 = arith.constant 0 : i32
    return %arg1, %c0_i32, %c0_i32_0 : i32, i32, i32
  }
  func.func @transform_4(%arg0: i32, %arg1: i32) -> (i32, i32, i32) {
    %c0_i32 = arith.constant 0 : i32
    %c0_i32_0 = arith.constant 0 : i32
    %c0_i32_1 = arith.constant 0 : i32
    return %arg1, %c0_i32, %c0_i32_0 : i32, i32, i32
  }
  func.func @transform_5(%arg0: i32, %arg1: i32) -> (i32, i32) {
    %c0_i32 = arith.constant 0 : i32
    %c0_i32_0 = arith.constant 0 : i32
    %c0_i32_1 = arith.constant 0 : i32
    return %c0_i32, %c0_i32_0 : i32, i32
  }
  func.func @transform_6(%arg0: i32, %arg1: i32) -> (i32, i32, i32) {
    %c0_i32 = arith.constant 0 : i32
    %c0_i32_0 = arith.constant 0 : i32
    %c0_i32_1 = arith.constant 0 : i32
    return %arg0, %c0_i32, %c0_i32_0 : i32, i32, i32
  }
}

</mosaic_0001>

<llo_original>
// kernel: tpu_custom_call.1
$region0: #{tpu_custom_call.1}
  #allocation0 [shape = 'u32[]', space=smem, size = 0x4, offset = 0x4, fixed_abs, tag = 'smem constant byte address 0x4 - core index']
  #allocation1 [shape = 'u32[144,128]{1,0:T(1,128)}', space=vmem, size = 0x12000, scoped, tag = 'internal scratch']
  %s0 = inlined_call_operand.vmem [shape: bf16[8,8,32], index: 0, kind: input, shape index: {}]
  %s1 = inlined_call_operand.vmem [shape: bf16[4,32,8], index: 1, kind: input, shape index: {}]
  %s2 = inlined_call_operand.vmem [shape: bf16[4,32,8], index: 2, kind: input, shape index: {}]
  %s3 = inlined_call_operand.vmem [shape: bf16[4,32,8], index: 3, kind: input, shape index: {}]
  %s4 = inlined_call_operand.vmem [shape: bf16[4,8,32], index: 4, kind: input, shape index: {}]
  %s5 = inlined_call_operand.vmem [shape: f32[1,32], index: 5, kind: input, shape index: {}]
  %s6 = inlined_call_operand.hbm [shape: f32[8,8,32], index: 6, kind: output, shape index: {}]
  %s7 = sld [smem:[#allocation0]]
  $region61: #{tpu_custom_call.1} parent=0
    _
  %s9 = ssub.s32 1, %s7
  %s10 = scalar_select 0, %s9, %s7
  $region1: #{tpu_custom_call.1} parent=0
    #allocation2 [shape = 'u8[16384]{0}', space=vmem, size = 0x4000, scoped, tag = 'output window, operand 0']
    #allocation3 [shape = 's32[2]{0}', space=sflag, size = 0x8, scoped, tag = 'scoped memory for tpu_custom_call.1']
    %11 = vsyncpa [#allocation3], 0
    %s12 = scalar_lea.sflag [#allocation3], 1
    %13 = vsyncpa %s12, 0
    loop: start=0, step=1, limit=18
    $region2: #{tpu_custom_call.1} parent=1 // loop_pre_header
      _
    $region3: #{tpu_custom_call.1} parent=1 // loop_header
      %s15 = sphi 0, %s19
      %p16 = scmp.ge.s32.totalorder %s15, 18
      %s22 = sphi 0, %s34
      %s23 = sphi 0, %s30
      %s24 = sphi 0, %s22
      %s25 = sphi 0, %s23
      %s26 = sphi 0, %s24
      %s27 = sphi 0, %s25
      %s37 = sphi 0, %s39
      %s40 = sphi 0, %s37
      %s41 = sphi 0, %s40
      %s57 = sphi 0, %s41
      %s63 = sphi 0, %s65
      %s66 = sphi 0, %s63
      %s67 = sphi 0, %s66
      %s83 = sphi 0, %s67
      %s89 = sphi 0, %s91
      %s92 = sphi 0, %s89
      %s93 = sphi 0, %s92
      %s109 = sphi 0, %s93
      %s115 = sphi 0, %s117
      %s118 = sphi 0, %s115
      %s119 = sphi 0, %s118
      %s135 = sphi 0, %s119
      %s141 = sphi 0, %s143
      %s144 = sphi 0, %s141
      %s145 = sphi 0, %s144
      %s161 = sphi 0, %s145
      %s165 = sphi 0, %s165
      %s167 = sphi 0, %s165
      %s168 = sphi 0, %s167
      %s182 = sphi 0, %s168
      %s188 = sphi 0, %s190
      %s191 = sphi 0, %s188
      %s192 = sphi 0, %s191
      %s208 = sphi 0, %s192
    $region4: #{tpu_custom_call.1} parent=1 // loop_header_branch
      %18 = sbr.rel (%p16) target = $region8
    $region5: #{tpu_custom_call.1} parent=1 // loop_body
      %s20 = ssub.s32 %s15, 1
      %s21 = ssub.s32 %s15, 2
      %s28 = sadd.s32 1, %s23
      %p29 = scmp.ge.s32.totalorder %s28, 4
      %s30 = scalar_select %p29, 0, %s28
      %s31 = sadd.s32 1, %s22
      %s32 = scalar_select %p29, %s31, %s22
      %p33 = scmp.ge.s32.totalorder %s32, 4
      %s34 = scalar_select %p33, 0, %s32
      %s35 = ssub.s32 %s22, %s34
      %p36 = scmp.eq.s32.totalorder %s35, 0
      %s38 = sadd.s32 %s37, 1
      %s39 = scalar_select %p36, %s37, %s38
      %p42 = pneg %p36
      %p43 = scmp.eq.s32.totalorder %s15, 15
      %p44 = por %p42, %p43
      %p45 = scmp.ne.s32.totalorder %s37, %s40
      %p46 = scmp.eq.s32.totalorder %s15, 0
      %p47 = por %p45, %p46
      %p48 = scmp.ne.s32.totalorder %s37, %s40
      %p49 = scmp.eq.s32.totalorder %s20, 15
      %p50 = por %p48, %p49
      %p51 = scmp.ne.s32.totalorder %s40, %s41
      %p52 = scmp.eq.s32.totalorder %s20, 0
      %p53 = por %p51, %p52
      %p54 = scmp.ne.s32.totalorder %s40, %s41
      %p55 = scmp.eq.s32.totalorder %s21, 15
      %p56 = por %p54, %p55
      %p58 = scmp.ne.s32.totalorder %s41, %s57
      %p59 = scmp.eq.s32.totalorder %s21, 0
      %p60 = por %p58, %p59
      %s61 = ssub.s32 %s23, %s30
      %p62 = scmp.eq.s32.totalorder %s61, 0
      %s64 = sadd.s32 %s63, 1
      %s65 = scalar_select %p62, %s63, %s64
      %p68 = pneg %p62
      %p69 = scmp.eq.s32.totalorder %s15, 15
      %p70 = por %p68, %p69
      %p71 = scmp.ne.s32.totalorder %s63, %s66
      %p72 = scmp.eq.s32.totalorder %s15, 0
      %p73 = por %p71, %p72
      %p74 = scmp.ne.s32.totalorder %s63, %s66
      %p75 = scmp.eq.s32.totalorder %s20, 15
      %p76 = por %p74, %p75
      %p77 = scmp.ne.s32.totalorder %s66, %s67
      %p78 = scmp.eq.s32.totalorder %s20, 0
      %p79 = por %p77, %p78
      %p80 = scmp.ne.s32.totalorder %s66, %s67
      %p81 = scmp.eq.s32.totalorder %s21, 15
      %p82 = por %p80, %p81
      %p84 = scmp.ne.s32.totalorder %s67, %s83
      %p85 = scmp.eq.s32.totalorder %s21, 0
      %p86 = por %p84, %p85
      %s87 = ssub.s32 %s23, %s30
      %p88 = scmp.eq.s32.totalorder %s87, 0
      %s90 = sadd.s32 %s89, 1
      %s91 = scalar_select %p88, %s89, %s90
      %p94 = pneg %p88
      %p95 = scmp.eq.s32.totalorder %s15, 15
      %p96 = por %p94, %p95
      %p97 = scmp.ne.s32.totalorder %s89, %s92
      %p98 = scmp.eq.s32.totalorder %s15, 0
      %p99 = por %p97, %p98
      %p100 = scmp.ne.s32.totalorder %s89, %s92
      %p101 = scmp.eq.s32.totalorder %s20, 15
      %p102 = por %p100, %p101
      %p103 = scmp.ne.s32.totalorder %s92, %s93
      %p104 = scmp.eq.s32.totalorder %s20, 0
      %p105 = por %p103, %p104
      %p106 = scmp.ne.s32.totalorder %s92, %s93
      %p107 = scmp.eq.s32.totalorder %s21, 15
      %p108 = por %p106, %p107
      %p110 = scmp.ne.s32.totalorder %s93, %s109
      %p111 = scmp.eq.s32.totalorder %s21, 0
      %p112 = por %p110, %p111
      %s113 = ssub.s32 %s23, %s30
      %p114 = scmp.eq.s32.totalorder %s113, 0
      %s116 = sadd.s32 %s115, 1
      %s117 = scalar_select %p114, %s115, %s116
      %p120 = pneg %p114
      %p121 = scmp.eq.s32.totalorder %s15, 15
      %p122 = por %p120, %p121
      %p123 = scmp.ne.s32.totalorder %s115, %s118
      %p124 = scmp.eq.s32.totalorder %s15, 0
      %p125 = por %p123, %p124
      %p126 = scmp.ne.s32.totalorder %s115, %s118
      %p127 = scmp.eq.s32.totalorder %s20, 15
      %p128 = por %p126, %p127
      %p129 = scmp.ne.s32.totalorder %s118, %s119
      %p130 = scmp.eq.s32.totalorder %s20, 0
      %p131 = por %p129, %p130
      %p132 = scmp.ne.s32.totalorder %s118, %s119
      %p133 = scmp.eq.s32.totalorder %s21, 15
      %p134 = por %p132, %p133
      %p136 = scmp.ne.s32.totalorder %s119, %s135
      %p137 = scmp.eq.s32.totalorder %s21, 0
      %p138 = por %p136, %p137
      %s139 = ssub.s32 %s23, %s30
      %p140 = scmp.eq.s32.totalorder %s139, 0
      %s142 = sadd.s32 %s141, 1
      %s143 = scalar_select %p140, %s141, %s142
      %p146 = pneg %p140
      %p147 = scmp.eq.s32.totalorder %s15, 15
      %p148 = por %p146, %p147
      %p149 = scmp.ne.s32.totalorder %s141, %s144
      %p150 = scmp.eq.s32.totalorder %s15, 0
      %p151 = por %p149, %p150
      %p152 = scmp.ne.s32.totalorder %s141, %s144
      %p153 = scmp.eq.s32.totalorder %s20, 15
      %p154 = por %p152, %p153
      %p155 = scmp.ne.s32.totalorder %s144, %s145
      %p156 = scmp.eq.s32.totalorder %s20, 0
      %p157 = por %p155, %p156
      %p158 = scmp.ne.s32.totalorder %s144, %s145
      %p159 = scmp.eq.s32.totalorder %s21, 15
      %p160 = por %p158, %p159
      %p162 = scmp.ne.s32.totalorder %s145, %s161
      %p163 = scmp.eq.s32.totalorder %s21, 0
      %p164 = por %p162, %p163
      %s166 = sadd.s32 %s165, 1
      %p169 = scmp.eq.s32.totalorder %s15, 15
      %p170 = scmp.ne.s32.totalorder %s165, %s167
      %p171 = scmp.eq.s32.totalorder %s15, 0
      %p172 = por %p170, %p171
      %p173 = scmp.ne.s32.totalorder %s165, %s167
      %p174 = scmp.eq.s32.totalorder %s20, 15
      %p175 = por %p173, %p174
      %p176 = scmp.ne.s32.totalorder %s167, %s168
      %p177 = scmp.eq.s32.totalorder %s20, 0
      %p178 = por %p176, %p177
      %p179 = scmp.ne.s32.totalorder %s167, %s168
      %p180 = scmp.eq.s32.totalorder %s21, 15
      %p181 = por %p179, %p180
      %p183 = scmp.ne.s32.totalorder %s168, %s182
      %p184 = scmp.eq.s32.totalorder %s21, 0
      %p185 = por %p183, %p184
      %s186 = ssub.s32 %s22, %s34
      %p187 = scmp.eq.s32.totalorder %s186, 0
      %s189 = sadd.s32 %s188, 1
      %s190 = scalar_select %p187, %s188, %s189
      %p193 = pneg %p187
      %p194 = scmp.eq.s32.totalorder %s15, 15
      %p195 = por %p193, %p194
      %p196 = scmp.ne.s32.totalorder %s188, %s191
      %p197 = scmp.eq.s32.totalorder %s15, 0
      %p198 = por %p196, %p197
      %p199 = scmp.ne.s32.totalorder %s188, %s191
      %p200 = scmp.eq.s32.totalorder %s20, 15
      %p201 = por %p199, %p200
      %p202 = scmp.ne.s32.totalorder %s191, %s192
      %p203 = scmp.eq.s32.totalorder %s20, 0
      %p204 = por %p202, %p203
      %p205 = scmp.ne.s32.totalorder %s191, %s192
      %p206 = scmp.eq.s32.totalorder %s21, 15
      %p207 = por %p205, %p206
      %p209 = scmp.ne.s32.totalorder %s192, %s208
      %p210 = scmp.eq.s32.totalorder %s21, 0
      %p211 = por %p209, %p210
      %p212 = scmp.le.s32.totalorder 1, %s15
      %p213 = scmp.lt.s32.totalorder %s15, 17
      %p214 = pnand %p212, %p213
      %p215 = pneg %p214
      // Predicated region
      $region9: #{tpu_custom_call.1} parent=5 // pred_check
        _
      $region10: #{tpu_custom_call.1} parent=5 // pred_check_branch
        %217 = sbr.rel (%p214) target = $region12
      $region11: #{tpu_custom_call.1} parent=5 // pred_region
        %s218 = ssub.s32 %s15, 1
        // Predicated region
        $region13: #{tpu_custom_call.1} parent=11 // pred_check
          %p219 = pneg %p178
        $region14: #{tpu_custom_call.1} parent=11 // pred_check_branch
          %221 = sbr.rel (%p219) target = $region16
        $region15: #{tpu_custom_call.1} parent=11 // pred_region
          _
        $region16: #{tpu_custom_call.1} parent=11 // pred_fallthru
          _
      $region12: #{tpu_custom_call.1} parent=5 // pred_fallthru
        _
      %p222 = scmp.lt.s32.totalorder %s15, 16
      // Predicated region
      $region17: #{tpu_custom_call.1} parent=5 // pred_check
        %p223 = pneg %p222
      $region18: #{tpu_custom_call.1} parent=5 // pred_check_branch
        %225 = sbr.rel (%p223) target = $region20
      $region19: #{tpu_custom_call.1} parent=5 // pred_region
        // Predicated region
        $region21: #{tpu_custom_call.1} parent=19 // pred_check
          %p226 = pneg %p47
        $region22: #{tpu_custom_call.1} parent=19 // pred_check_branch
          %228 = sbr.rel (%p226) target = $region24
        $region23: #{tpu_custom_call.1} parent=19 // pred_region
          %s229 = smul.u32 2, %s22
          %p230 = scmp.lt.s32.totalorder %s229, 7
          %s231 = scalar_select %p230, %s229, 7
          %s232 = smul.addr %s231, 4
          %s233 = scalar_lea.vmem %s0, %s232
          %s234 = smul.u32 2, %s22
        $region24: #{tpu_custom_call.1} parent=19 // pred_fallthru
          _
        // Predicated region
        $region25: #{tpu_custom_call.1} parent=19 // pred_check
          %p235 = pneg %p73
        $region26: #{tpu_custom_call.1} parent=19 // pred_check_branch
          %237 = sbr.rel (%p235) target = $region28
        $region27: #{tpu_custom_call.1} parent=19 // pred_region
          %p238 = scmp.lt.s32.totalorder %s23, 3
          %s239 = scalar_select %p238, %s23, 3
          %s240 = smul.addr %s239, 4
          %s241 = smul.addr %s240, 4
          %s242 = scalar_lea.vmem %s1, %s241
        $region28: #{tpu_custom_call.1} parent=19 // pred_fallthru
          _
        // Predicated region
        $region29: #{tpu_custom_call.1} parent=19 // pred_check
          %p243 = pneg %p99
        $region30: #{tpu_custom_call.1} parent=19 // pred_check_branch
          %245 = sbr.rel (%p243) target = $region32
        $region31: #{tpu_custom_call.1} parent=19 // pred_region
          %p246 = scmp.lt.s32.totalorder %s23, 3
          %s247 = scalar_select %p246, %s23, 3
          %s248 = smul.addr %s247, 4
          %s249 = smul.addr %s248, 4
          %s250 = scalar_lea.vmem %s2, %s249
        $region32: #{tpu_custom_call.1} parent=19 // pred_fallthru
          _
        // Predicated region
        $region33: #{tpu_custom_call.1} parent=19 // pred_check
          %p251 = pneg %p125
        $region34: #{tpu_custom_call.1} parent=19 // pred_check_branch
          %253 = sbr.rel (%p251) target = $region36
        $region35: #{tpu_custom_call.1} parent=19 // pred_region
          %p254 = scmp.lt.s32.totalorder %s23, 3
          %s255 = scalar_select %p254, %s23, 3
          %s256 = smul.addr %s255, 4
          %s257 = smul.addr %s256, 4
          %s258 = scalar_lea.vmem %s3, %s257
        $region36: #{tpu_custom_call.1} parent=19 // pred_fallthru
          _
        // Predicated region
        $region37: #{tpu_custom_call.1} parent=19 // pred_check
          %p259 = pneg %p151
        $region38: #{tpu_custom_call.1} parent=19 // pred_check_branch
          %261 = sbr.rel (%p259) target = $region40
        $region39: #{tpu_custom_call.1} parent=19 // pred_region
          %p262 = scmp.lt.s32.totalorder %s23, 3
          %s263 = scalar_select %p262, %s23, 3
          %s264 = smul.addr %s263, 4
          %s265 = scalar_lea.vmem %s4, %s264
        $region40: #{tpu_custom_call.1} parent=19 // pred_fallthru
          _
      $region20: #{tpu_custom_call.1} parent=5 // pred_fallthru
        _
      %p266 = scmp.le.s32.totalorder 1, %s15
      %p267 = scmp.lt.s32.totalorder %s15, 17
      %p268 = pnand %p266, %p267
      %p269 = pneg %p268
      // Predicated region
      $region41: #{tpu_custom_call.1} parent=5 // pred_check
        _
      $region42: #{tpu_custom_call.1} parent=5 // pred_check_branch
        %271 = sbr.rel (%p268) target = $region44
      $region43: #{tpu_custom_call.1} parent=5 // pred_region
        %s272 = ssub.s32 %s15, 1
        %s273 = smul.u32 2, %s24
        %p274 = scmp.lt.s32.totalorder %s273, 7
        %s275 = scalar_select %p274, %s273, 7
        %s276 = smul.addr %s275, 4
        %s277 = scalar_lea.vmem %s0, %s276
        %p278 = pneg %p53
        %p279 = pneg %p50
        %p280 = scmp.lt.s32.totalorder %s25, 3
        %s281 = scalar_select %p280, %s25, 3
        %s282 = smul.addr %s281, 4
        %s283 = smul.addr %s282, 4
        %s284 = scalar_lea.vmem %s1, %s283
        %p285 = pneg %p79
        %p286 = pneg %p76
        %p287 = scmp.lt.s32.totalorder %s25, 3
        %s288 = scalar_select %p287, %s25, 3
        %s289 = smul.addr %s288, 4
        %s290 = smul.addr %s289, 4
        %s291 = scalar_lea.vmem %s2, %s290
        %p292 = pneg %p105
        %p293 = pneg %p102
        %p294 = scmp.lt.s32.totalorder %s25, 3
        %s295 = scalar_select %p294, %s25, 3
        %s296 = smul.addr %s295, 4
        %s297 = smul.addr %s296, 4
        %s298 = scalar_lea.vmem %s3, %s297
        %p299 = pneg %p131
        %p300 = pneg %p128
        %p301 = scmp.lt.s32.totalorder %s25, 3
        %s302 = scalar_select %p301, %s25, 3
        %s303 = smul.addr %s302, 4
        %s304 = scalar_lea.vmem %s4, %s303
        %p305 = pneg %p157
        %p306 = pneg %p154
        %p307 = pneg %p178
        %p308 = pneg %p175
        %p309 = pneg %p204
        %p310 = pneg %p201
        %s311 = sand.u32 %s191, 1
        %s312 = scalar_lea.sflag [#allocation3], %s311
        %s313 = sand.u32 %s191, 1
        %s314 = smul.addr %s313, 16
        %s315 = scalar_lea.vmem [#allocation2], %s314
        %s316 = smul.u32 2, %s24
        %p317 = scmp.lt.s32.totalorder %s316, 7
        %s318 = scalar_select %p317, %s316, 7
        %s319 = smul.addr %s318, 4
        %s320 = scalar_lea.vmem %s0, %s319
        %s321 = smul.u32 2, %s24
        %p322 = scmp.lt.s32.totalorder %s25, 3
        %s323 = scalar_select %p322, %s25, 3
        %s324 = smul.addr %s323, 4
        %s325 = smul.addr %s324, 4
        %s326 = scalar_lea.vmem %s1, %s325
        %p327 = scmp.lt.s32.totalorder %s25, 3
        %s328 = scalar_select %p327, %s25, 3
        %s329 = smul.addr %s328, 4
        %s330 = smul.addr %s329, 4
        %s331 = scalar_lea.vmem %s2, %s330
        %p332 = scmp.lt.s32.totalorder %s25, 3
        %s333 = scalar_select %p332, %s25, 3
        %s334 = smul.addr %s333, 4
        %s335 = smul.addr %s334, 4
        %s336 = scalar_lea.vmem %s3, %s335
        %p337 = scmp.lt.s32.totalorder %s25, 3
        %s338 = scalar_select %p337, %s25, 3
        %s339 = smul.addr %s338, 4
        %s340 = scalar_lea.vmem %s4, %s339
        %s341 = smul.u32 2, %s24
        %v343 = vld [vmem:[%s320] sm:$0xf]
        %v344 = vld [vmem:[%s320 + $0x4] sm:$0xf]
        %v345 = vld [vmem:[%s326] sm:$0xf]
        %v346 = vld [vmem:[%s326 + $0x4] sm:$0xf]
        %v347 = vld [vmem:[%s326 + $0x8] sm:$0xf]
        %v348 = vld [vmem:[%s326 + $0xc] sm:$0xf]
        %v351 = vunpack.c.l.b16 %v343
        %v352 = vunpack.c.l.b16 %v344
        %v353 = vpack.c.b16 %v352, %v351
        %v358 = vunpack.c.l.b16 %v345
        %v359 = vunpack.c.l.b16 %v346
        %v360 = vunpack.c.l.b16 %v347
        %v361 = vunpack.c.l.b16 %v348
        %v362 = vpack.c.b16 %v359, %v358
        %v363 = vpack.c.b16 %v361, %v360
        %vm366 = vcmask 261120
        %v368 = vsel %vm366, %v353, 0
        %370 = vmatprep.subr.bf16.mxu0 0
        %371 = vmatpush1.bf16.msra.mxu0 %v362
        %372 = vmatprep.subr.bf16.mxu0 0
        %373 = vmatpush1.bf16.msra.mxu0 %v363
        %374 = vmatprep.subr.bf16.mxu0 0
        %375 = vmatpush1.bf16.msra.mxu0 0
        %376 = vmatprep.subr.bf16.mxu0 0
        %377 = vmatpush1.bf16.msra.mxu0 0
        %378 = vmatprep.subr.bf16.mxu0 0
        %379 = vmatpush1.bf16.msra.mxu0 0
        %380 = vmatprep.subr.bf16.mxu0 0
        %381 = vmatpush1.bf16.msra.mxu0 0
        %382 = vmatprep.subr.bf16.mxu0 0
        %383 = vmatpush1.bf16.msra.mxu0 0
        %384 = vmatprep.subr.bf16.mxu0 0
        %385 = vmatpush1.bf16.msra.mxu0 0
        %386 = vmatprep.subr.bf16.mxu0 0
        %387 = vmatpush1.bf16.msra.mxu0 0
        %388 = vmatprep.subr.bf16.mxu0 0
        %389 = vmatpush1.bf16.msra.mxu0 0
        %390 = vmatprep.subr.bf16.mxu0 0
        %391 = vmatpush1.bf16.msra.mxu0 0
        %392 = vmatprep.subr.bf16.mxu0 0
        %393 = vmatpush1.bf16.msra.mxu0 0
        %394 = vmatprep.subr.bf16.mxu0 0
        %395 = vmatpush1.bf16.msra.mxu0 0
        %396 = vmatprep.subr.bf16.mxu0 0
        %397 = vmatpush1.bf16.msra.mxu0 0
        %398 = vmatprep.subr.bf16.mxu0 0
        %399 = vmatpush1.bf16.msra.mxu0 0
        %400 = vmatprep.subr.bf16.mxu0 0
        %401 = vmatpush1.bf16.msra.mxu0 0
        %402 = vmatprep.mubr.bf16.mxu0 0
        %403 = vmatmul.mubr.bf16.gmra.mrb[0].mxu0 %v368
        %v404 = vpop.f32.mrb[0].mxu0
        %v405 = vadd.f32 0.0, %v404
        %v406 = vpop.f32.mrb[0].mxu0
        %v407 = vpop.f32.mrb[0].mxu0
        %v408 = vadd.f32 0.0, %v407
        %v409 = vpop.f32.mrb[0].mxu0
        %410 = vdwg.mxu0
        %v411 = vld [vmem:[%s331] sm:$0xf]
        %v412 = vld [vmem:[%s331 + $0x4] sm:$0xf]
        %v413 = vld [vmem:[%s331 + $0x8] sm:$0xf]
        %v414 = vld [vmem:[%s331 + $0xc] sm:$0xf]
        %v419 = vunpack.c.l.b16 %v411
        %v420 = vunpack.c.l.b16 %v412
        %v421 = vunpack.c.l.b16 %v413
        %v422 = vunpack.c.l.b16 %v414
        %v423 = vpack.c.b16 %v420, %v419
        %v424 = vpack.c.b16 %v422, %v421
        %427 = vmatprep.subr.bf16.mxu0 0
        %428 = vmatpush1.bf16.msra.mxu0 %v423
        %429 = vmatprep.subr.bf16.mxu0 0
        %430 = vmatpush1.bf16.msra.mxu0 %v424
        %431 = vmatprep.subr.bf16.mxu0 0
        %432 = vmatpush1.bf16.msra.mxu0 0
        %433 = vmatprep.subr.bf16.mxu0 0
        %434 = vmatpush1.bf16.msra.mxu0 0
        %435 = vmatprep.subr.bf16.mxu0 0
        %436 = vmatpush1.bf16.msra.mxu0 0
        %437 = vmatprep.subr.bf16.mxu0 0
        %438 = vmatpush1.bf16.msra.mxu0 0
        %439 = vmatprep.subr.bf16.mxu0 0
        %440 = vmatpush1.bf16.msra.mxu0 0
        %441 = vmatprep.subr.bf16.mxu0 0
        %442 = vmatpush1.bf16.msra.mxu0 0
        %443 = vmatprep.subr.bf16.mxu0 0
        %444 = vmatpush1.bf16.msra.mxu0 0
        %445 = vmatprep.subr.bf16.mxu0 0
        %446 = vmatpush1.bf16.msra.mxu0 0
        %447 = vmatprep.subr.bf16.mxu0 0
        %448 = vmatpush1.bf16.msra.mxu0 0
        %449 = vmatprep.subr.bf16.mxu0 0
        %450 = vmatpush1.bf16.msra.mxu0 0
        %451 = vmatprep.subr.bf16.mxu0 0
        %452 = vmatpush1.bf16.msra.mxu0 0
        %453 = vmatprep.subr.bf16.mxu0 0
        %454 = vmatpush1.bf16.msra.mxu0 0
        %455 = vmatprep.subr.bf16.mxu0 0
        %456 = vmatpush1.bf16.msra.mxu0 0
        %457 = vmatprep.subr.bf16.mxu0 0
        %458 = vmatpush1.bf16.msra.mxu0 0
        %459 = vmatprep.mubr.bf16.mxu0 0
        %460 = vmatmul.mubr.bf16.gmra.mrb[0].mxu0 %v368
        %v461 = vpop.f32.mrb[0].mxu0
        %v462 = vadd.f32 0.0, %v461
        %v463 = vpop.f32.mrb[0].mxu0
        %v464 = vpop.f32.mrb[0].mxu0
        %v465 = vadd.f32 0.0, %v464
        %v466 = vpop.f32.mrb[0].mxu0
        %467 = vdwg.mxu0
        %v468 = vld [vmem:[%s336] sm:$0xf]
        %v469 = vld [vmem:[%s336 + $0x4] sm:$0xf]
        %v470 = vld [vmem:[%s336 + $0x8] sm:$0xf]
        %v471 = vld [vmem:[%s336 + $0xc] sm:$0xf]
        %v476 = vunpack.c.l.b16 %v468
        %v477 = vunpack.c.l.b16 %v469
        %v478 = vunpack.c.l.b16 %v470
        %v479 = vunpack.c.l.b16 %v471
        %v480 = vpack.c.b16 %v477, %v476
        %v481 = vpack.c.b16 %v479, %v478
        %484 = vmatprep.subr.bf16.mxu0 0
        %485 = vmatpush1.bf16.msra.mxu0 %v480
        %486 = vmatprep.subr.bf16.mxu0 0
        %487 = vmatpush1.bf16.msra.mxu0 %v481
        %488 = vmatprep.subr.bf16.mxu0 0
        %489 = vmatpush1.bf16.msra.mxu0 0
        %490 = vmatprep.subr.bf16.mxu0 0
        %491 = vmatpush1.bf16.msra.mxu0 0
        %492 = vmatprep.subr.bf16.mxu0 0
        %493 = vmatpush1.bf16.msra.mxu0 0
        %494 = vmatprep.subr.bf16.mxu0 0
        %495 = vmatpush1.bf16.msra.mxu0 0
        %496 = vmatprep.subr.bf16.mxu0 0
        %497 = vmatpush1.bf16.msra.mxu0 0
        %498 = vmatprep.subr.bf16.mxu0 0
        %499 = vmatpush1.bf16.msra.mxu0 0
        %500 = vmatprep.subr.bf16.mxu0 0
        %501 = vmatpush1.bf16.msra.mxu0 0
        %502 = vmatprep.subr.bf16.mxu0 0
        %503 = vmatpush1.bf16.msra.mxu0 0
        %504 = vmatprep.subr.bf16.mxu0 0
        %505 = vmatpush1.bf16.msra.mxu0 0
        %506 = vmatprep.subr.bf16.mxu0 0
        %507 = vmatpush1.bf16.msra.mxu0 0
        %508 = vmatprep.subr.bf16.mxu0 0
        %509 = vmatpush1.bf16.msra.mxu0 0
        %510 = vmatprep.subr.bf16.mxu0 0
        %511 = vmatpush1.bf16.msra.mxu0 0
        %512 = vmatprep.subr.bf16.mxu0 0
        %513 = vmatpush1.bf16.msra.mxu0 0
        %514 = vmatprep.subr.bf16.mxu0 0
        %515 = vmatpush1.bf16.msra.mxu0 0
        %516 = vmatprep.mubr.bf16.mxu0 0
        %517 = vmatmul.mubr.bf16.gmra.mrb[0].mxu0 %v368
        %v518 = vpop.f32.mrb[0].mxu0
        %v519 = vadd.f32 0.0, %v518
        %v520 = vpop.f32.mrb[0].mxu0
        %v521 = vpop.f32.mrb[0].mxu0
        %v522 = vadd.f32 0.0, %v521
        %v523 = vpop.f32.mrb[0].mxu0
        %524 = vdwg.mxu0
        %v525 = vpack.c.bf16 %v405, %v405
        %v526 = vpack.c.bf16 %v408, %v408
        %v527 = vpack.c.bf16 %v462, %v462
        %v528 = vpack.c.bf16 %v465, %v465
        %v529 = vpack.c.bf16 %v519, %v519
        %v530 = vpack.c.bf16 %v522, %v522
        %v531 = vlaneseq
        %v532 = vshrl.u32 %v531, 7
        %v533 = vlaneseq
        %v534 = vand.u32 %v533, 127
        %vm535 = vcmp.ge.s32.totalorder %v532, %v534
        %v536 = vsel %vm535, 0.0, -1e+30
        %vm537 = vcmask 64512
        %v539 = vsel %vm537, %v525, 0
        %v542 = vsel %vm537, %v527, 0
        %544 = vmatprep.subr.bf16.mxu0 0
        %545 = vmatpush1.bf16.xpose.msra.mxu0 %v542
        %546 = vmatprep.subr.bf16.mxu0 0
        %547 = vmatpush1.bf16.xpose.msra.mxu0 0
        %548 = vmatprep.subr.bf16.mxu0 0
        %549 = vmatpush1.bf16.xpose.msra.mxu0 0
        %550 = vmatprep.subr.bf16.mxu0 0
        %551 = vmatpush1.bf16.xpose.msra.mxu0 0
        %552 = vmatprep.subr.bf16.mxu0 0
        %553 = vmatpush1.bf16.xpose.msra.mxu0 0
        %554 = vmatprep.subr.bf16.mxu0 0
        %555 = vmatpush1.bf16.xpose.msra.mxu0 0
        %556 = vmatprep.subr.bf16.mxu0 0
        %557 = vmatpush1.bf16.xpose.msra.mxu0 0
        %558 = vmatprep.subr.bf16.mxu0 0
        %559 = vmatpush1.bf16.xpose.msra.mxu0 0
        %560 = vmatprep.subr.bf16.mxu0 0
        %561 = vmatpush1.bf16.xpose.msra.mxu0 0
        %562 = vmatprep.subr.bf16.mxu0 0
        %563 = vmatpush1.bf16.xpose.msra.mxu0 0
        %564 = vmatprep.subr.bf16.mxu0 0
        %565 = vmatpush1.bf16.xpose.msra.mxu0 0
        %566 = vmatprep.subr.bf16.mxu0 0
        %567 = vmatpush1.bf16.xpose.msra.mxu0 0
        %568 = vmatprep.subr.bf16.mxu0 0
        %569 = vmatpush1.bf16.xpose.msra.mxu0 0
        %570 = vmatprep.subr.bf16.mxu0 0
        %571 = vmatpush1.bf16.xpose.msra.mxu0 0
        %572 = vmatprep.subr.bf16.mxu0 0
        %573 = vmatpush1.bf16.xpose.msra.mxu0 0
        %574 = vmatprep.subr.bf16.mxu0 0
        %575 = vmatpush1.bf16.xpose.msra.mxu0 0
        %576 = vmatprep.mubr.bf16.mxu0 0
        %577 = vmatmul.mubr.bf16.gmra.mrb[0].mxu0 %v539
        %v578 = vpop.f32.mrb[0].mxu0
        %v579 = vadd.f32 %v536, %v578
        %v580 = vpop.f32.mrb[0].mxu0
        %v581 = vpop.f32.mrb[0].mxu0
        %v582 = vpop.f32.mrb[0].mxu0
        %583 = vdwg.mxu0
        %v585 = vsel %vm537, %v526, 0
        %v588 = vsel %vm537, %v528, 0
        %590 = vmatprep.subr.bf16.mxu0 0
        %591 = vmatpush1.bf16.xpose.msra.mxu0 %v588
        %592 = vmatprep.subr.bf16.mxu0 0
        %593 = vmatpush1.bf16.xpose.msra.mxu0 0
        %594 = vmatprep.subr.bf16.mxu0 0
        %595 = vmatpush1.bf16.xpose.msra.mxu0 0
        %596 = vmatprep.subr.bf16.mxu0 0
        %597 = vmatpush1.bf16.xpose.msra.mxu0 0
        %598 = vmatprep.subr.bf16.mxu0 0
        %599 = vmatpush1.bf16.xpose.msra.mxu0 0
        %600 = vmatprep.subr.bf16.mxu0 0
        %601 = vmatpush1.bf16.xpose.msra.mxu0 0
        %602 = vmatprep.subr.bf16.mxu0 0
        %603 = vmatpush1.bf16.xpose.msra.mxu0 0
        %604 = vmatprep.subr.bf16.mxu0 0
        %605 = vmatpush1.bf16.xpose.msra.mxu0 0
        %606 = vmatprep.subr.bf16.mxu0 0
        %607 = vmatpush1.bf16.xpose.msra.mxu0 0
        %608 = vmatprep.subr.bf16.mxu0 0
        %609 = vmatpush1.bf16.xpose.msra.mxu0 0
        %610 = vmatprep.subr.bf16.mxu0 0
        %611 = vmatpush1.bf16.xpose.msra.mxu0 0
        %612 = vmatprep.subr.bf16.mxu0 0
        %613 = vmatpush1.bf16.xpose.msra.mxu0 0
        %614 = vmatprep.subr.bf16.mxu0 0
        %615 = vmatpush1.bf16.xpose.msra.mxu0 0
        %616 = vmatprep.subr.bf16.mxu0 0
        %617 = vmatpush1.bf16.xpose.msra.mxu0 0
        %618 = vmatprep.subr.bf16.mxu0 0
        %619 = vmatpush1.bf16.xpose.msra.mxu0 0
        %620 = vmatprep.subr.bf16.mxu0 0
        %621 = vmatpush1.bf16.xpose.msra.mxu0 0
        %622 = vmatprep.mubr.bf16.mxu0 0
        %623 = vmatmul.mubr.bf16.gmra.mrb[0].mxu0 %v585
        %v624 = vpop.f32.mrb[0].mxu0
        %v625 = vadd.f32 %v536, %v624
        %v626 = vpop.f32.mrb[0].mxu0
        %v627 = vpop.f32.mrb[0].mxu0
        %v628 = vpop.f32.mrb[0].mxu0
        %629 = vdwg.mxu0
        %v630 = vsel %vm537, %v579, -inf
        %631 = vmax.xlane.f32.xlu0 %v630
        %v632 = vpop.xlane.xlu0 %631
        %v633 = vsel %vm537, %v625, -inf
        %634 = vmax.xlane.f32.xlu0 %v633
        %v635 = vpop.xlane.xlu0 %634
        %v636 = vsub.f32 %v579, %v632
        %v637 = vsub.f32 %v625, %v635
        %v638 = vmul.f32 %v636, 1.442695
        %v639 = vpow.pop %v638
        %v640 = vmul.f32 %v637, 1.442695
        %v641 = vpow.pop %v640
        %v642 = vsel %vm537, %v639, 0.0
        %643 = vadd.xlane.f32.xlu0 %v642
        %v644 = vpop.xlane.xlu0 %643
        %v645 = vsel %vm537, %v641, 0.0
        %646 = vadd.xlane.f32.xlu0 %v645
        %v647 = vpop.xlane.xlu0 %646
        %v648 = vrcp.pop %v644
        %v649 = vrcp.pop %v647
        %v650 = vmul.f32 %v644, %v648
        %v651 = vmul.f32 %v647, %v649
        %v652 = vsub.f32 2.0, %v650
        %v653 = vsub.f32 2.0, %v651
        %v654 = vmul.f32 %v648, %v652
        %v655 = vmul.f32 %v649, %v653
        %v656 = vmul.f32 %v639, %v654
        %v657 = vmul.f32 %v641, %v655
        %v658 = vpack.c.bf16 %v656, %v656
        %v659 = vpack.c.bf16 %v657, %v657
        %v661 = vsel %vm537, %v658, 0
        %vm663 = vcmask 1043456
        %v665 = vsel %vm663, %v529, 0
        %667 = vmatprep.subr.bf16.mxu0 0
        %668 = vmatpush1.bf16.msra.mxu0 %v665
        %669 = vmatprep.subr.bf16.mxu0 0
        %670 = vmatpush1.bf16.msra.mxu0 0
        %671 = vmatprep.subr.bf16.mxu0 0
        %672 = vmatpush1.bf16.msra.mxu0 0
        %673 = vmatprep.subr.bf16.mxu0 0
        %674 = vmatpush1.bf16.msra.mxu0 0
        %675 = vmatprep.subr.bf16.mxu0 0
        %676 = vmatpush1.bf16.msra.mxu0 0
        %677 = vmatprep.subr.bf16.mxu0 0
        %678 = vmatpush1.bf16.msra.mxu0 0
        %679 = vmatprep.subr.bf16.mxu0 0
        %680 = vmatpush1.bf16.msra.mxu0 0
        %681 = vmatprep.subr.bf16.mxu0 0
        %682 = vmatpush1.bf16.msra.mxu0 0
        %683 = vmatprep.subr.bf16.mxu0 0
        %684 = vmatpush1.bf16.msra.mxu0 0
        %685 = vmatprep.subr.bf16.mxu0 0
        %686 = vmatpush1.bf16.msra.mxu0 0
        %687 = vmatprep.subr.bf16.mxu0 0
        %688 = vmatpush1.bf16.msra.mxu0 0
        %689 = vmatprep.subr.bf16.mxu0 0
        %690 = vmatpush1.bf16.msra.mxu0 0
        %691 = vmatprep.subr.bf16.mxu0 0
        %692 = vmatpush1.bf16.msra.mxu0 0
        %693 = vmatprep.subr.bf16.mxu0 0
        %694 = vmatpush1.bf16.msra.mxu0 0
        %695 = vmatprep.subr.bf16.mxu0 0
        %696 = vmatpush1.bf16.msra.mxu0 0
        %697 = vmatprep.subr.bf16.mxu0 0
        %698 = vmatpush1.bf16.msra.mxu0 0
        %699 = vmatprep.mubr.bf16.mxu0 0
        %700 = vmatmul.mubr.bf16.gmra.mrb[0].mxu0 %v661
        %v701 = vpop.f32.mrb[0].mxu0
        %v702 = vadd.f32 0.0, %v701
        %v703 = vpop.f32.mrb[0].mxu0
        %v704 = vpop.f32.mrb[0].mxu0
        %v705 = vpop.f32.mrb[0].mxu0
        %706 = vdwg.mxu0
        %v708 = vsel %vm537, %v659, 0
        %v711 = vsel %vm663, %v530, 0
        %713 = vmatprep.subr.bf16.mxu0 0
        %714 = vmatpush1.bf16.msra.mxu0 %v711
        %715 = vmatprep.subr.bf16.mxu0 0
        %716 = vmatpush1.bf16.msra.mxu0 0
        %717 = vmatprep.subr.bf16.mxu0 0
        %718 = vmatpush1.bf16.msra.mxu0 0
        %719 = vmatprep.subr.bf16.mxu0 0
        %720 = vmatpush1.bf16.msra.mxu0 0
        %721 = vmatprep.subr.bf16.mxu0 0
        %722 = vmatpush1.bf16.msra.mxu0 0
        %723 = vmatprep.subr.bf16.mxu0 0
        %724 = vmatpush1.bf16.msra.mxu0 0
        %725 = vmatprep.subr.bf16.mxu0 0
        %726 = vmatpush1.bf16.msra.mxu0 0
        %727 = vmatprep.subr.bf16.mxu0 0
        %728 = vmatpush1.bf16.msra.mxu0 0
        %729 = vmatprep.subr.bf16.mxu0 0
        %730 = vmatpush1.bf16.msra.mxu0 0
        %731 = vmatprep.subr.bf16.mxu0 0
        %732 = vmatpush1.bf16.msra.mxu0 0
        %733 = vmatprep.subr.bf16.mxu0 0
        %734 = vmatpush1.bf16.msra.mxu0 0
        %735 = vmatprep.subr.bf16.mxu0 0
        %736 = vmatpush1.bf16.msra.mxu0 0
        %737 = vmatprep.subr.bf16.mxu0 0
        %738 = vmatpush1.bf16.msra.mxu0 0
        %739 = vmatprep.subr.bf16.mxu0 0
        %740 = vmatpush1.bf16.msra.mxu0 0
        %741 = vmatprep.subr.bf16.mxu0 0
        %742 = vmatpush1.bf16.msra.mxu0 0
        %743 = vmatprep.subr.bf16.mxu0 0
        %744 = vmatpush1.bf16.msra.mxu0 0
        %745 = vmatprep.mubr.bf16.mxu0 0
        %746 = vmatmul.mubr.bf16.gmra.mrb[0].mxu0 %v708
        %v747 = vpop.f32.mrb[0].mxu0
        %v748 = vadd.f32 0.0, %v747
        %v749 = vpop.f32.mrb[0].mxu0
        %v750 = vpop.f32.mrb[0].mxu0
        %v751 = vpop.f32.mrb[0].mxu0
        %752 = vdwg.mxu0
        %v753 = vpack.c.bf16 %v748, %v702
        %v754 = vld [vmem:[%s340] sm:$0xf]
        %v756 = vsel %vm537, %v753, 0
        %v759 = vsel %vm663, %v754, 0
        %761 = vmatprep.subr.bf16.mxu0 0
        %762 = vmatpush1.bf16.msra.mxu0 %v759
        %763 = vmatprep.subr.bf16.mxu0 0
        %764 = vmatpush1.bf16.msra.mxu0 0
        %765 = vmatprep.subr.bf16.mxu0 0
        %766 = vmatpush1.bf16.msra.mxu0 0
        %767 = vmatprep.subr.bf16.mxu0 0
        %768 = vmatpush1.bf16.msra.mxu0 0
        %769 = vmatprep.subr.bf16.mxu0 0
        %770 = vmatpush1.bf16.msra.mxu0 0
        %771 = vmatprep.subr.bf16.mxu0 0
        %772 = vmatpush1.bf16.msra.mxu0 0
        %773 = vmatprep.subr.bf16.mxu0 0
        %774 = vmatpush1.bf16.msra.mxu0 0
        %775 = vmatprep.subr.bf16.mxu0 0
        %776 = vmatpush1.bf16.msra.mxu0 0
        %777 = vmatprep.subr.bf16.mxu0 0
        %778 = vmatpush1.bf16.msra.mxu0 0
        %779 = vmatprep.subr.bf16.mxu0 0
        %780 = vmatpush1.bf16.msra.mxu0 0
        %781 = vmatprep.subr.bf16.mxu0 0
        %782 = vmatpush1.bf16.msra.mxu0 0
        %783 = vmatprep.subr.bf16.mxu0 0
        %784 = vmatpush1.bf16.msra.mxu0 0
        %785 = vmatprep.subr.bf16.mxu0 0
        %786 = vmatpush1.bf16.msra.mxu0 0
        %787 = vmatprep.subr.bf16.mxu0 0
        %788 = vmatpush1.bf16.msra.mxu0 0
        %789 = vmatprep.subr.bf16.mxu0 0
        %790 = vmatpush1.bf16.msra.mxu0 0
        %791 = vmatprep.subr.bf16.mxu0 0
        %792 = vmatpush1.bf16.msra.mxu0 0
        %793 = vmatprep.mubr.bf16.mxu0 0
        %794 = vmatmul.mubr.bf16.gmra.mrb[0].mxu0 %v756
        %v795 = vpop.f32.mrb[0].mxu0
        %v796 = vadd.f32 0.0, %v795
        %v797 = vpop.f32.mrb[0].mxu0
        %v798 = vpop.f32.mrb[0].mxu0
        %v799 = vadd.f32 0.0, %v798
        %v800 = vpop.f32.mrb[0].mxu0
        %801 = vdwg.mxu0
        %p802 = scmp.eq.s32.totalorder %s25, 0
        // Predicated region
        $region45: #{tpu_custom_call.1} parent=43 // pred_check
          %p803 = pneg %p802
        $region46: #{tpu_custom_call.1} parent=43 // pred_check_branch
          %805 = sbr.rel (%p803) target = $region48
        $region47: #{tpu_custom_call.1} parent=43 // pred_region
          %v806 = vld [vmem:[%s5] sm:$0x1]
          %v808 = vlaneseq
          %v809 = vshrl.u32 %v808, 7
          %v810 = vsub.s32 0, %v809
          %v811 = vrot.slane %v806, %v810
          %813 = vst.msk [vmem:[%s315] sm:$0xff] %vm366, %v811
          %814 = vst.msk [vmem:[%s315 + $0x8] sm:$0xff] %vm366, %v811
        $region48: #{tpu_custom_call.1} parent=43 // pred_fallthru
          _
        %v815 = vld [vmem:[%s315] sm:$0xff]
        %v816 = vld [vmem:[%s315 + $0x8] sm:$0xff]
        %v817 = vadd.f32 %v815, %v796
        %v818 = vadd.f32 %v816, %v799
        %819 = vst.msk [vmem:[%s315] sm:$0xff] %vm366, %v817
        %820 = vst.msk [vmem:[%s315 + $0x8] sm:$0xff] %vm366, %v818
        %s821 = sand.u32 %s191, 1
        %s822 = scalar_lea.sflag [#allocation3], %s821
        %s823 = sand.u32 %s191, 1
        %s824 = smul.addr %s823, 16
        %s825 = scalar_lea.vmem [#allocation2], %s824
        // Predicated region
        $region49: #{tpu_custom_call.1} parent=43 // pred_check
          %p826 = pneg %p201
        $region50: #{tpu_custom_call.1} parent=43 // pred_check_branch
          %828 = sbr.rel (%p826) target = $region52
        $region51: #{tpu_custom_call.1} parent=43 // pred_region
          %s829 = smul.u32 2, %s24
          %s831 = ssub.s32 256, 256
          %832 = vsyncadd %s822, %s831
          %s833 = smul.addr %s829, 128
          %s834 = scalar_lea.hbm %s6, %s833
          %s835 = sshll.u32 %s825, 4
          %s836 = int_to_ptr.vmem [resolvable:$true] %s835
          %841 = dma.vmem_to_hbm [thread:$0]  %s836, 256, %s834, %s822, 128, 128, 8
        $region52: #{tpu_custom_call.1} parent=43 // pred_fallthru
          _
      $region44: #{tpu_custom_call.1} parent=5 // pred_fallthru
        _
      %p842 = scmp.le.s32.totalorder 2, %s15
      // Predicated region
      $region53: #{tpu_custom_call.1} parent=5 // pred_check
        %p843 = pneg %p842
      $region54: #{tpu_custom_call.1} parent=5 // pred_check_branch
        %845 = sbr.rel (%p843) target = $region56
      $region55: #{tpu_custom_call.1} parent=5 // pred_region
        %s846 = ssub.s32 %s15, 2
        // Predicated region
        $region57: #{tpu_custom_call.1} parent=55 // pred_check
          %p847 = pneg %p207
        $region58: #{tpu_custom_call.1} parent=55 // pred_check_branch
          %849 = sbr.rel (%p847) target = $region60
        $region59: #{tpu_custom_call.1} parent=55 // pred_region
          %s850 = sand.u32 %s192, 1
          %s851 = scalar_lea.sflag [#allocation3], %s850
          %s852 = sand.u32 %s192, 1
          %s853 = smul.addr %s852, 16
          %s854 = scalar_lea.vmem [#allocation2], %s853
          %855 = dma.done %s851, 256
        $region60: #{tpu_custom_call.1} parent=55 // pred_fallthru
          _
      $region56: #{tpu_custom_call.1} parent=5 // pred_fallthru
        _
    $region6: #{tpu_custom_call.1} parent=1 // loop_footer
      %s19 = sadd.s32 1, %s15
    $region7: #{tpu_custom_call.1} parent=1 // loop_footer_branch
      %14 = sbr.rel target = $region3
    $region8: #{tpu_custom_call.1} parent=1 // loop_exit
      _
    %856 = vsyncpa [#allocation3], 1
    %s857 = scalar_lea.sflag [#allocation3], 1
    %858 = vsyncpa %s857, 1

</llo_original>
